<compile_context>
chip_gen: v5e
topology: v5e:2x2
jax: 0.10.0
libtpu: 0.0.40
codegen_flags: <defaults>
</compile_context>

<pallas_src>
import functools

import numpy as np
import jax
import jax.numpy as jnp
from jax.experimental import pallas as pl
from jax.experimental.pallas import tpu as pltpu


def _round_up(x, m):
    return ((x + m - 1) // m) * m


def naf_kernel(state_ref, action_ref, z_ref, w1_ref, w2_ref, whead_ref, bias_ref,
               out_ref, *, action_size, hidden):
    A, H = action_size, hidden

    state = state_ref[...]                    # [TB, S]
    action = action_ref[...]                  # [TB, A]
    z = z_ref[...]                            # [TB, A]

    # Biases packed one segment per sublane row: row selects are free and every
    # lane slice starts at lane 0 (no XLU rotations per grid step).
    b1 = bias_ref[0:1, :H]
    b2 = bias_ref[1:2, :H]
    bh = bias_ref[2:3, :2 * A + 1]

    # Trunk: two Linear + ReLU layers (MXU matmuls, f32 accumulation). Casting
    # the LHS to the weight dtype makes the same kernel run bf16 weights /
    # activations (no-op at the default f32).
    w1 = w1_ref[...]
    h1 = jnp.maximum(
        jnp.dot(state.astype(w1.dtype), w1, preferred_element_type=jnp.float32) + b1,
        0.0)
    w2 = w2_ref[...]
    h2 = jnp.maximum(
        jnp.dot(h1.astype(w2.dtype), w2, preferred_element_type=jnp.float32) + b2,
        0.0)

    # Fused heads: [mu | L-diagonal | V] in one matmul, sliced by lane range.
    wh = whead_ref[...]
    heads = jnp.dot(h2.astype(wh.dtype), wh, preferred_element_type=jnp.float32) + bh

    # Single tanh EUP stream over the contiguous [mu | diag] range.
    t = jnp.tanh(heads[:, :2 * A])
    mu = t[:, :A]                             # [TB, A]
    d = t[:, A:2 * A]                         # diag entries of the tril fill
    value = heads[:, 2 * A:2 * A + 1]         # [TB, 1]

    # Reference's elementwise P = L * L^T is diagonal with entries exp(2 d).
    ed = jnp.exp(d)
    emd = jnp.exp(-d)                         # exact; EUP has slack -> free
    p_diag = ed * ed

    diff = action - mu
    adv = -0.5 * jnp.sum(diff * diff * p_diag, axis=-1, keepdims=True)   # [TB, 1]
    q = adv + value

    # MultivariateNormal(mu, P^-1) sample: Cholesky(P^-1) = diag(exp(-d)).
    new_action = jnp.clip(mu + z * emd, -1.0, 1.0)

    # Single store of the narrow packed tile: mu | new_action | adv | q | V | pad.
    pad_w = out_ref.shape[-1] - (2 * A + 3)
    cols = [mu, new_action, adv, q, value]
    if pad_w > 0:
        cols.append(jnp.zeros((mu.shape[0], pad_w), jnp.float32))
    out_ref[...] = jnp.concatenate(cols, axis=-1)


def _pick_tile_b(B):
    """Batch tile: full batch up to 128 rows; above that, cap at 512 rows while
    keeping >=2 grid steps so v7x's two TensorCores both get work. Per-step
    overhead ~0.35us; double-buffered tile footprint is only ~O(100 B)/row."""
    if B <= 128:
        return B
    return int(min(512, _round_up((B + 1) // 2, 8)))


def naf_forward(state, action, z, w1, w2, w_head, bias_packed, *, tile_b=None):
    B, S = state.shape
    A = action.shape[1]
    H = w1.shape[1]
    assert w_head.shape == (H, 2 * A + 1)
    assert bias_packed.shape[0] == 3

    # Narrow packed output: ~10x less HBM writeback than a 128-lane f32 slab;
    # one masked store per tile is far cheaper than the extra write traffic.
    out_w = _round_up(2 * A + 3, 8)

    if tile_b is None:
        tile_b = _pick_tile_b(B)
    assert tile_b == B or tile_b % 8 == 0

    kernel = functools.partial(naf_kernel, action_size=A, hidden=H)

    out = pl.pallas_call(
        kernel,
        out_shape=jax.ShapeDtypeStruct((B, out_w), jnp.float32),
        grid_spec=pltpu.PrefetchScalarGridSpec(
            num_scalar_prefetch=0,
            grid=(pl.cdiv(B, tile_b),),
            in_specs=[
                pl.BlockSpec((tile_b, S), lambda i: (i, 0)),       # state
                pl.BlockSpec((tile_b, A), lambda i: (i, 0)),       # action
                pl.BlockSpec((tile_b, A), lambda i: (i, 0)),       # noise z
                pl.BlockSpec((S, H), lambda i: (0, 0)),            # weights stay
                pl.BlockSpec((H, H), lambda i: (0, 0)),            #  resident
                pl.BlockSpec((H, 2 * A + 1), lambda i: (0, 0)),    #  across the
                pl.BlockSpec(bias_packed.shape, lambda i: (0, 0)),  # batch grid
            ],
            out_specs=pl.BlockSpec((tile_b, out_w), lambda i: (i, 0)),
        ),
        compiler_params=pltpu.CompilerParams(
            dimension_semantics=("parallel",)),   # megacore split on v7x
    )(state, action, z, w1, w2, w_head, bias_packed)

    mu = out[:, :A]
    new_action = out[:, A:2 * A]
    advantage = out[:, 2 * A:2 * A + 1]
    q = out[:, 2 * A + 1:2 * A + 2]
    value = out[:, 2 * A + 2:2 * A + 3]
    return mu, q, new_action, advantage, value


def init_params(key, state_dim, hidden, action_size):
    """Deterministic Linear-style init. Weights stored as [in, out] (pre-transposed)."""
    tri = action_size * (action_size + 1) // 2

    def linear(k, fan_in, fan_out):
        kw, kb = jax.random.split(k)
        bound = 1.0 / np.sqrt(fan_in)
        w = jax.random.uniform(kw, (fan_in, fan_out), jnp.float32, -bound, bound)
        b = jax.random.uniform(kb, (1, fan_out), jnp.float32, -bound, bound)
        return w, b

    ks = jax.random.split(key, 5)
    w1, b1 = linear(ks[0], state_dim, hidden)
    w2, b2 = linear(ks[1], hidden, hidden)
    wmu, bmu = linear(ks[2], hidden, action_size)
    wl, bl = linear(ks[3], hidden, tri)
    wv, bv = linear(ks[4], hidden, 1)
    return dict(w1=w1, b1=b1, w2=w2, b2=b2, wmu=wmu, bmu=bmu,
                wl=wl, bl=bl, wv=wv, bv=bv)


def diag_indices(action_size):
    """Positions of the main-diagonal entries in the row-major tril fill."""
    return np.array([i * (i + 1) // 2 + i for i in range(action_size)],
                    dtype=np.int32)


def pack_params(params, action_size, *, weights_dtype=jnp.float32):
    """Host-side packing: fused head weights, sublane-packed biases.

    weights_dtype=jnp.bfloat16 is the first lever once hidden/batch grow
    (native MXU dtype on v6e/v7x; on v5e prefer bf16 weights only). f32 is kept
    here because the toy shapes are nowhere near MXU-bound.
    """
    idx = diag_indices(action_size)
    wl_d = params["wl"][:, idx]               # [H, A] diagonal columns of L head
    bl_d = params["bl"][:, idx]               # [1, A]
    w_head = jnp.concatenate([params["wmu"], wl_d, params["wv"]], axis=1)   # [H, 2A+1]
    b_head = jnp.concatenate([params["bmu"], bl_d, params["bv"]], axis=1)   # [1, 2A+1]

    H = params["w1"].shape[1]
    W = max(H, 2 * action_size + 1)

    def _row(b):
        return jnp.pad(b, ((0, 0), (0, W - b.shape[1])))

    # One bias segment per sublane row so every in-kernel slice starts at lane 0.
    bias = jnp.concatenate([_row(params["b1"]), _row(params["b2"]), _row(b_head)],
                           axis=0)            # [3, W]

    cast = lambda w: w.astype(weights_dtype)
    return cast(params["w1"]), cast(params["w2"]), cast(w_head), bias


def naf_reference(state, action, z, params, action_size):
    """Pure-JAX reference (same math as the Pallas kernel / torch module)."""
    A = action_size
    h1 = jax.nn.relu(state @ params["w1"] + params["b1"])
    h2 = jax.nn.relu(h1 @ params["w2"] + params["b2"])
    mu = jnp.tanh(h2 @ params["wmu"] + params["bmu"])
    le = jnp.tanh(h2 @ params["wl"] + params["bl"])
    value = h2 @ params["wv"] + params["bv"]
    d = le[:, diag_indices(A)]
    p_diag = jnp.exp(2.0 * d)
    diff = action - mu
    adv = -0.5 * jnp.sum(diff * diff * p_diag, axis=-1, keepdims=True)
    q = adv + value
    na = jnp.clip(mu + z * jnp.exp(-d), -1.0, 1.0)
    return mu, q, na, adv, value


if __name__ == "__main__":
    B, STATE_DIM, HIDDEN, ACTION_SIZE = 8, 16, 32, 4

    key = jax.random.PRNGKey(0)
    k_state, k_action, k_noise, k_params = jax.random.split(key, 4)

    state = jax.random.uniform(k_state, (B, STATE_DIM), jnp.float32, -1.0, 1.0)
    action = jax.random.uniform(k_action, (B, ACTION_SIZE), jnp.float32, -1.0, 1.0)
    z = jax.random.normal(k_noise, (B, ACTION_SIZE), jnp.float32)  # N(0, I) draw

    params = init_params(k_params, STATE_DIM, HIDDEN, ACTION_SIZE)
    w1, w2, w_head, bias = pack_params(params, ACTION_SIZE)

    mu, q, new_action, advantage, value = naf_forward(
        state, action, z, w1, w2, w_head, bias)
    jax.block_until_ready((mu, q, new_action, advantage, value))

    assert mu.shape == (B, ACTION_SIZE)
    assert q.shape == (B, 1)
    assert new_action.shape == (B, ACTION_SIZE)
    assert advantage.shape == (B, 1)
    assert value.shape == (B, 1)

    # correctness vs. pure-JAX reference (approx reciprocal removed -> tight tol)
    r_mu, r_q, r_na, r_adv, r_v = naf_reference(state, action, z, params, ACTION_SIZE)
    np.testing.assert_allclose(np.asarray(mu), np.asarray(r_mu), rtol=2e-3, atol=2e-3)
    np.testing.assert_allclose(np.asarray(q), np.asarray(r_q), rtol=2e-3, atol=2e-3)
    np.testing.assert_allclose(np.asarray(advantage), np.asarray(r_adv), rtol=2e-3, atol=2e-3)
    np.testing.assert_allclose(np.asarray(value), np.asarray(r_v), rtol=2e-3, atol=2e-3)
    np.testing.assert_allclose(np.asarray(new_action), np.asarray(r_na), rtol=2e-3, atol=2e-3)

    print("KERNEL_OK")
</pallas_src>

<mosaic_0001>
module attributes {stable_mosaic.version = 11 : i64} {
  func.func @naf_kernel(%arg0: i32, %arg1: memref<8x16xf32, #tpu.memory_space<vmem>>, %arg2: memref<8x4xf32, #tpu.memory_space<vmem>>, %arg3: memref<8x4xf32, #tpu.memory_space<vmem>>, %arg4: memref<16x32xf32, #tpu.memory_space<vmem>>, %arg5: memref<32x32xf32, #tpu.memory_space<vmem>>, %arg6: memref<32x9xf32, #tpu.memory_space<vmem>>, %arg7: memref<3x32xf32, #tpu.memory_space<vmem>>, %arg8: memref<8x16xf32, #tpu.memory_space<vmem>>) attributes {dimension_semantics = [#tpu.dimension_semantics<parallel>], iteration_bounds = array<i64: 1>, scalar_prefetch = 0 : i64, scratch_operands = 0 : i64, tpu.core_type = #tpu.core_type<tc>, window_params = [{transform_indices = @transform_0, window_bounds = array<i64: 8, 16>}, {transform_indices = @transform_1, window_bounds = array<i64: 8, 4>}, {transform_indices = @transform_2, window_bounds = array<i64: 8, 4>}, {pipeline_mode = #tpu.pipeline_mode<synchronous>, transform_indices = @transform_3, window_bounds = array<i64: 16, 32>}, {pipeline_mode = #tpu.pipeline_mode<synchronous>, transform_indices = @transform_4, window_bounds = array<i64: 32, 32>}, {pipeline_mode = #tpu.pipeline_mode<synchronous>, transform_indices = @transform_5, window_bounds = array<i64: 32, 9>}, {pipeline_mode = #tpu.pipeline_mode<synchronous>, transform_indices = @transform_6, window_bounds = array<i64: 3, 32>}, {transform_indices = @transform_7, window_bounds = array<i64: 8, 16>}]} {
    %c0 = arith.constant 0 : index
    %c0_0 = arith.constant 0 : index
    %0 = vector.load %arg1[%c0, %c0_0] : memref<8x16xf32, #tpu.memory_space<vmem>>, vector<8x16xf32>
    %c0_1 = arith.constant 0 : index
    %c0_2 = arith.constant 0 : index
    %1 = vector.load %arg2[%c0_1, %c0_2] : memref<8x4xf32, #tpu.memory_space<vmem>>, vector<8x4xf32>
    %c0_3 = arith.constant 0 : index
    %c0_4 = arith.constant 0 : index
    %2 = vector.load %arg3[%c0_3, %c0_4] : memref<8x4xf32, #tpu.memory_space<vmem>>, vector<8x4xf32>
    %c0_5 = arith.constant 0 : index
    %c0_6 = arith.constant 0 : index
    %3 = vector.load %arg7[%c0_5, %c0_6] : memref<3x32xf32, #tpu.memory_space<vmem>>, vector<1x32xf32>
    %c1 = arith.constant 1 : index
    %c0_7 = arith.constant 0 : index
    %4 = vector.load %arg7[%c1, %c0_7] : memref<3x32xf32, #tpu.memory_space<vmem>>, vector<1x32xf32>
    %c2 = arith.constant 2 : index
    %c0_8 = arith.constant 0 : index
    %5 = vector.load %arg7[%c2, %c0_8] : memref<3x32xf32, #tpu.memory_space<vmem>>, vector<1x9xf32>
    %c0_9 = arith.constant 0 : index
    %c0_10 = arith.constant 0 : index
    %6 = vector.load %arg4[%c0_9, %c0_10] : memref<16x32xf32, #tpu.memory_space<vmem>>, vector<16x32xf32>
    %cst = arith.constant dense<0.000000e+00> : vector<8x32xf32>
    %7 = tpu.matmul %0, %6, %cst {dimension_numbers = #tpu.dot_dimension_numbers<[1], [0], [0], [1], [0, 0, 1, 1], [], []>} : vector<8x16xf32>, vector<16x32xf32>, vector<8x32xf32> -> vector<8x32xf32>
    %8 = vector.broadcast %3 : vector<1x32xf32> to vector<8x32xf32>
    %9 = arith.addf %7, %8 : vector<8x32xf32>
    %cst_11 = arith.constant 0.000000e+00 : f32
    %10 = vector.broadcast %cst_11 : f32 to vector<8x32xf32>
    %11 = arith.maximumf %9, %10 : vector<8x32xf32>
    %c0_12 = arith.constant 0 : index
    %c0_13 = arith.constant 0 : index
    %12 = vector.load %arg5[%c0_12, %c0_13] : memref<32x32xf32, #tpu.memory_space<vmem>>, vector<32x32xf32>
    %cst_14 = arith.constant dense<0.000000e+00> : vector<8x32xf32>
    %13 = tpu.matmul %11, %12, %cst_14 {dimension_numbers = #tpu.dot_dimension_numbers<[1], [0], [0], [1], [0, 0, 1, 1], [], []>} : vector<8x32xf32>, vector<32x32xf32>, vector<8x32xf32> -> vector<8x32xf32>
    %14 = vector.broadcast %4 : vector<1x32xf32> to vector<8x32xf32>
    %15 = arith.addf %13, %14 : vector<8x32xf32>
    %cst_15 = arith.constant 0.000000e+00 : f32
    %16 = vector.broadcast %cst_15 : f32 to vector<8x32xf32>
    %17 = arith.maximumf %15, %16 : vector<8x32xf32>
    %c0_16 = arith.constant 0 : index
    %c0_17 = arith.constant 0 : index
    %18 = vector.load %arg6[%c0_16, %c0_17] : memref<32x9xf32, #tpu.memory_space<vmem>>, vector<32x9xf32>
    %cst_18 = arith.constant dense<0.000000e+00> : vector<8x9xf32>
    %19 = tpu.matmul %17, %18, %cst_18 {dimension_numbers = #tpu.dot_dimension_numbers<[1], [0], [0], [1], [0, 0, 1, 1], [], []>} : vector<8x32xf32>, vector<32x9xf32>, vector<8x9xf32> -> vector<8x9xf32>
    %20 = vector.broadcast %5 : vector<1x9xf32> to vector<8x9xf32>
    %21 = arith.addf %19, %20 : vector<8x9xf32>
    %22 = vector.extract_strided_slice %21 {offsets = [0, 0], sizes = [8, 8], strides = [1, 1]} : vector<8x9xf32> to vector<8x8xf32>
    %23 = math.tanh %22 : vector<8x8xf32>
    %24 = vector.extract_strided_slice %23 {offsets = [0, 0], sizes = [8, 4], strides = [1, 1]} : vector<8x8xf32> to vector<8x4xf32>
    %25 = vector.extract_strided_slice %23 {offsets = [0, 4], sizes = [8, 4], strides = [1, 1]} : vector<8x8xf32> to vector<8x4xf32>
    %26 = vector.extract_strided_slice %21 {offsets = [0, 8], sizes = [8, 1], strides = [1, 1]} : vector<8x9xf32> to vector<8x1xf32>
    %27 = math.exp %25 : vector<8x4xf32>
    %cst_19 = arith.constant 0.000000e+00 : f32
    %28 = vector.broadcast %cst_19 : f32 to vector<8x4xf32>
    %29 = arith.subf %28, %25 : vector<8x4xf32>
    %30 = math.exp %29 : vector<8x4xf32>
    %31 = arith.mulf %27, %27 : vector<8x4xf32>
    %32 = arith.subf %1, %24 : vector<8x4xf32>
    %33 = arith.mulf %32, %32 : vector<8x4xf32>
    %34 = arith.mulf %33, %31 : vector<8x4xf32>
    %cst_20 = arith.constant dense<0.000000e+00> : vector<8xf32>
    %35 = vector.multi_reduction <add>, %34, %cst_20 [1] : vector<8x4xf32> to vector<8xf32>
    %36 = vector.shape_cast %35 : vector<8xf32> to vector<8x1xf32>
    %cst_21 = arith.constant -5.000000e-01 : f32
    %37 = vector.broadcast %cst_21 : f32 to vector<8x1xf32>
    %38 = arith.mulf %37, %36 : vector<8x1xf32>
    %39 = arith.addf %38, %26 : vector<8x1xf32>
    %40 = arith.mulf %2, %30 : vector<8x4xf32>
    %41 = arith.addf %24, %40 : vector<8x4xf32>
    %cst_22 = arith.constant -1.000000e+00 : f32
    %cst_23 = arith.constant 1.000000e+00 : f32
    %42 = vector.broadcast %cst_22 : f32 to vector<8x4xf32>
    %43 = arith.maximumf %42, %41 : vector<8x4xf32>
    %44 = vector.broadcast %cst_23 : f32 to vector<8x4xf32>
    %45 = arith.minimumf %44, %43 : vector<8x4xf32>
    %cst_24 = arith.constant 0.000000e+00 : f32
    %46 = vector.broadcast %cst_24 : f32 to vector<8x5xf32>
    %47 = tpu.concatenate %24, %45, %38, %39, %26, %46 in 1 : vector<8x4xf32>, vector<8x4xf32>, vector<8x1xf32>, vector<8x1xf32>, vector<8x1xf32>, vector<8x5xf32> -> vector<8x16xf32>
    %c0_25 = arith.constant 0 : index
    %c0_26 = arith.constant 0 : index
    %48 = vector.load %arg8[%c0_25, %c0_26] : memref<8x16xf32, #tpu.memory_space<vmem>>, vector<8x16xf32>
    tpu.vector_store %arg8[%c0_25, %c0_26], %47 {strides = array<i32>} : memref<8x16xf32, #tpu.memory_space<vmem>>, vector<8x16xf32>,
    return
  }
  func.func @transform_0(%arg0: i32) -> (i32, i32) {
    %c0_i32 = arith.constant 0 : i32
    %c0_i32_0 = arith.constant 0 : i32
    return %arg0, %c0_i32 : i32, i32
  }
  func.func @transform_1(%arg0: i32) -> (i32, i32) {
    %c0_i32 = arith.constant 0 : i32
    %c0_i32_0 = arith.constant 0 : i32
    return %arg0, %c0_i32 : i32, i32
  }
  func.func @transform_2(%arg0: i32) -> (i32, i32) {
    %c0_i32 = arith.constant 0 : i32
    %c0_i32_0 = arith.constant 0 : i32
    return %arg0, %c0_i32 : i32, i32
  }
  func.func @transform_3(%arg0: i32) -> (i32, i32) {
    %c0_i32 = arith.constant 0 : i32
    %c0_i32_0 = arith.constant 0 : i32
    %c0_i32_1 = arith.constant 0 : i32
    return %c0_i32, %c0_i32_0 : i32, i32
  }
  func.func @transform_4(%arg0: i32) -> (i32, i32) {
    %c0_i32 = arith.constant 0 : i32
    %c0_i32_0 = arith.constant 0 : i32
    %c0_i32_1 = arith.constant 0 : i32
    return %c0_i32, %c0_i32_0 : i32, i32
  }
  func.func @transform_5(%arg0: i32) -> (i32, i32) {
    %c0_i32 = arith.constant 0 : i32
    %c0_i32_0 = arith.constant 0 : i32
    %c0_i32_1 = arith.constant 0 : i32
    return %c0_i32, %c0_i32_0 : i32, i32
  }
  func.func @transform_6(%arg0: i32) -> (i32, i32) {
    %c0_i32 = arith.constant 0 : i32
    %c0_i32_0 = arith.constant 0 : i32
    %c0_i32_1 = arith.constant 0 : i32
    return %c0_i32, %c0_i32_0 : i32, i32
  }
  func.func @transform_7(%arg0: i32) -> (i32, i32) {
    %c0_i32 = arith.constant 0 : i32
    %c0_i32_0 = arith.constant 0 : i32
    return %arg0, %c0_i32 : i32, i32
  }
}

</mosaic_0001>

<llo_original>
// kernel: tpu_custom_call.1
$region0: #{tpu_custom_call.1}
  #allocation0 [shape = 'u32[]', space=smem, size = 0x4, offset = 0x4, fixed_abs, tag = 'smem constant byte address 0x4 - core index']
  #allocation1 [shape = 'u32[72,128]{1,0:T(1,128)}', space=vmem, size = 0x9000, scoped, tag = 'internal scratch']
  %s0 = inlined_call_operand.vmem [shape: f32[8,16], index: 0, kind: input, shape index: {}]
  %s1 = inlined_call_operand.vmem [shape: f32[8,4], index: 1, kind: input, shape index: {}]
  %s2 = inlined_call_operand.vmem [shape: f32[8,4], index: 2, kind: input, shape index: {}]
  %s3 = inlined_call_operand.vmem [shape: f32[16,32], index: 3, kind: input, shape index: {}]
  %s4 = inlined_call_operand.vmem [shape: f32[32,32], index: 4, kind: input, shape index: {}]
  %s5 = inlined_call_operand.vmem [shape: f32[32,9], index: 5, kind: input, shape index: {}]
  %s6 = inlined_call_operand.vmem [shape: f32[3,32], index: 6, kind: input, shape index: {}]
  %s7 = inlined_call_operand.hbm [shape: f32[8,16], index: 7, kind: output, shape index: {}]
  %s8 = sld [smem:[#allocation0]]
  $region38: #{tpu_custom_call.1} parent=0
    _
  %s10 = ssub.s32 1, %s8
  %s11 = scalar_select 0, %s10, %s8
  $region1: #{tpu_custom_call.1} parent=0
    #allocation2 [shape = 'u8[4096]{0}', space=vmem, size = 0x1000, scoped, tag = 'output window, operand 0, single buffered']
    #allocation3 [shape = 's32[1]{0}', space=sflag, size = 0x4, scoped, tag = 'scoped memory for tpu_custom_call.1']
    %12 = vsyncpa [#allocation3], 0
    // Predicated region
    $region2: #{tpu_custom_call.1} parent=1 // pred_check
      _
    $region3: #{tpu_custom_call.1} parent=1 // pred_check_branch
      %14 = sbr.rel (0) target = $region5
    $region4: #{tpu_custom_call.1} parent=1 // pred_region
      _
    $region5: #{tpu_custom_call.1} parent=1 // pred_fallthru
      _
    // Predicated region
    $region6: #{tpu_custom_call.1} parent=1 // pred_check
      _
    $region7: #{tpu_custom_call.1} parent=1 // pred_check_branch
      %16 = sbr.rel (0) target = $region9
    $region8: #{tpu_custom_call.1} parent=1 // pred_region
      _
    $region9: #{tpu_custom_call.1} parent=1 // pred_fallthru
      _
    // Predicated region
    $region10: #{tpu_custom_call.1} parent=1 // pred_check
      _
    $region11: #{tpu_custom_call.1} parent=1 // pred_check_branch
      %18 = sbr.rel (0) target = $region13
    $region12: #{tpu_custom_call.1} parent=1 // pred_region
      _
    $region13: #{tpu_custom_call.1} parent=1 // pred_fallthru
      _
    // Predicated region
    $region14: #{tpu_custom_call.1} parent=1 // pred_check
      _
    $region15: #{tpu_custom_call.1} parent=1 // pred_check_branch
      %20 = sbr.rel (0) target = $region17
    $region16: #{tpu_custom_call.1} parent=1 // pred_region
      _
    $region17: #{tpu_custom_call.1} parent=1 // pred_fallthru
      _
    // Predicated region
    $region18: #{tpu_custom_call.1} parent=1 // pred_check
      _
    $region19: #{tpu_custom_call.1} parent=1 // pred_check_branch
      %22 = sbr.rel (0) target = $region21
    $region20: #{tpu_custom_call.1} parent=1 // pred_region
      _
    $region21: #{tpu_custom_call.1} parent=1 // pred_fallthru
      _
    // Predicated region
    $region22: #{tpu_custom_call.1} parent=1 // pred_check
      _
    $region23: #{tpu_custom_call.1} parent=1 // pred_check_branch
      %24 = sbr.rel (0) target = $region25
    $region24: #{tpu_custom_call.1} parent=1 // pred_region
      _
    $region25: #{tpu_custom_call.1} parent=1 // pred_fallthru
      _
    // Predicated region
    $region26: #{tpu_custom_call.1} parent=1 // pred_check
      _
    $region27: #{tpu_custom_call.1} parent=1 // pred_check_branch
      %26 = sbr.rel (0) target = $region29
    $region28: #{tpu_custom_call.1} parent=1 // pred_region
      _
    $region29: #{tpu_custom_call.1} parent=1 // pred_fallthru
      _
    %v27 = vld [vmem:[%s0] sm:$0xff]
    %v28 = vld [vmem:[%s1] sm:$0xff]
    %v29 = vld [vmem:[%s2] sm:$0xff]
    %v30 = vld [vmem:[%s6] sm:$0x1]
    %v31 = vld [vmem:[%s6 + $0x1] sm:$0x1]
    %v32 = vld [vmem:[%s6 + $0x2] sm:$0x1]
    %v33 = vld [vmem:[%s3] sm:$0xff]
    %v34 = vld [vmem:[%s3 + $0x8] sm:$0xff]
    %v35 = vperm.slane %v30, 0
    %vm36 = vcmask 130048
    %v38 = vsel %vm36, %v27, 0
    %40 = vmatpush.msra.mxu0 0.0
    %41 = vmatpush.msra.mxu0 0.0
    %42 = vmatpush.msra.mxu0 0.0
    %43 = vmatpush.msra.mxu0 0.0
    %44 = vmatpush.msra.mxu0 0.0
    %45 = vmatpush.msra.mxu0 0.0
    %46 = vmatpush.msra.mxu0 0.0
    %47 = vmatpush.msra.mxu0 0.0
    %48 = vmatpush.msra.mxu0 0.0
    %49 = vmatpush.msra.mxu0 0.0
    %50 = vmatpush.msra.mxu0 0.0
    %51 = vmatpush.msra.mxu0 0.0
    %52 = vmatpush.msra.mxu0 0.0
    %53 = vmatpush.msra.mxu0 0.0
    %54 = vmatpush.msra.mxu0 %v34
    %55 = vmatpush.msra.mxu0 %v33
    %56 = vmatmul.f32.gmra.mxu0 %v38
    %v57 = vpop.f32.mrf.mxu0
    %v58 = vadd.f32 %v35, %v57
    %59 = vdwg.mxu0
    %v60 = vmax.f32 %v58, 0.0
    %v61 = vld [vmem:[%s4] sm:$0xff]
    %v62 = vld [vmem:[%s4 + $0x8] sm:$0xff]
    %v63 = vld [vmem:[%s4 + $0x10] sm:$0xff]
    %v64 = vld [vmem:[%s4 + $0x18] sm:$0xff]
    %v65 = vperm.slane %v31, 0
    %vm66 = vcmask 261120
    %v68 = vsel %vm66, %v60, 0
    %70 = vmatpush.msra.mxu0 0.0
    %71 = vmatpush.msra.mxu0 0.0
    %72 = vmatpush.msra.mxu0 0.0
    %73 = vmatpush.msra.mxu0 0.0
    %74 = vmatpush.msra.mxu0 0.0
    %75 = vmatpush.msra.mxu0 0.0
    %76 = vmatpush.msra.mxu0 0.0
    %77 = vmatpush.msra.mxu0 0.0
    %78 = vmatpush.msra.mxu0 0.0
    %79 = vmatpush.msra.mxu0 0.0
    %80 = vmatpush.msra.mxu0 0.0
    %81 = vmatpush.msra.mxu0 0.0
    %82 = vmatpush.msra.mxu0 %v64
    %83 = vmatpush.msra.mxu0 %v63
    %84 = vmatpush.msra.mxu0 %v62
    %85 = vmatpush.msra.mxu0 %v61
    %86 = vmatmul.f32.gmra.mxu0 %v68
    %v87 = vpop.f32.mrf.mxu0
    %v88 = vadd.f32 %v65, %v87
    %89 = vdwg.mxu0
    %v90 = vmax.f32 %v88, 0.0
    %v91 = vld [vmem:[%s5] sm:$0xff]
    %v92 = vld [vmem:[%s5 + $0x8] sm:$0xff]
    %v93 = vld [vmem:[%s5 + $0x10] sm:$0xff]
    %v94 = vld [vmem:[%s5 + $0x18] sm:$0xff]
    %v95 = vperm.slane %v32, 0
    %v97 = vsel %vm66, %v90, 0
    %99 = vmatpush.msra.mxu0 0.0
    %100 = vmatpush.msra.mxu0 0.0
    %101 = vmatpush.msra.mxu0 0.0
    %102 = vmatpush.msra.mxu0 0.0
    %103 = vmatpush.msra.mxu0 0.0
    %104 = vmatpush.msra.mxu0 0.0
    %105 = vmatpush.msra.mxu0 0.0
    %106 = vmatpush.msra.mxu0 0.0
    %107 = vmatpush.msra.mxu0 0.0
    %108 = vmatpush.msra.mxu0 0.0
    %109 = vmatpush.msra.mxu0 0.0
    %110 = vmatpush.msra.mxu0 0.0
    %111 = vmatpush.msra.mxu0 %v94
    %112 = vmatpush.msra.mxu0 %v93
    %113 = vmatpush.msra.mxu0 %v92
    %114 = vmatpush.msra.mxu0 %v91
    %115 = vmatmul.f32.gmra.mxu0 %v97
    %v116 = vpop.f32.mrf.mxu0
    %v117 = vadd.f32 %v95, %v116
    %118 = vdwg.mxu0
    %v119 = vtanh.pop %v117
    %v120 = vmul.f32 %v119, 1.442695
    %v121 = vpow.pop %v120
    %v122 = vsub.f32 0.0, %v119
    %v123 = vmul.f32 %v122, 1.442695
    %v124 = vpow.pop %v123
    %v125 = vmul.f32 %v121, %v121
    %v126 = vsub.f32 %v28, %v119
    %v127 = vmul.f32 %v126, %v126
    %129 = vrot.lane.b32.xlu0 %v125, 124
    %v130 = vpop.permute.xlu0 %129
    %v132 = vmul.f32 %v127, %v130
    %vm133 = vcmask 31744
    %v134 = vsel %vm133, %v132, 0.0
    %135 = vadd.xlane.f32.xlu0 %v134
    %v136 = vpop.xlane.xlu0 %135
    %v137 = vmul.f32 %v136, -0.5
    %v138 = vadd.f32 %v137, %v117
    %140 = vrot.lane.b32.xlu0 %v124, 124
    %v141 = vpop.permute.xlu0 %140
    %v143 = vmul.f32 %v29, %v141
    %v144 = vadd.f32 %v119, %v143
    %v145 = vmax.f32 %v144, -1.0
    %v146 = vmin.f32 %v145, 1.0
    %148 = vrot.lane.b32.xlu0 %v146, 4
    %v149 = vpop.permute.xlu0 %148
    %152 = vrot.lane.b32.xlu0 %v138, 1
    %v153 = vpop.permute.xlu0 %152
    %156 = vrot.lane.b32.xlu0 %v117, 2
    %v157 = vpop.permute.xlu0 %156
    %v159 = vsel %vm133, %v119, %v149
    %vm160 = vcmask 64512
    %v161 = vsel %vm160, %v159, %v137
    %vm162 = vcmask 72704
    %v163 = vsel %vm162, %v161, %v153
    %vm164 = vcmask 80896
    %v165 = vsel %vm164, %v163, %v157
    %vm166 = vcmask 89088
    %v167 = vsel %vm166, %v165, 0.0
    %168 = vst.msk [vmem:[#allocation2] sm:$0xff] %vm36, %v167
    // Predicated region
    $region30: #{tpu_custom_call.1} parent=1 // pred_check
      _
    $region31: #{tpu_custom_call.1} parent=1 // pred_check_branch
      %170 = sbr.rel (0) target = $region33
    $region32: #{tpu_custom_call.1} parent=1 // pred_region
      %172 = vsyncadd [#allocation3], 0
      %s174 = sshll.u32 [#allocation2], 4
      %s175 = int_to_ptr.vmem [resolvable:$true] %s174
      %s176 = sshll.u32 %s7, 4
      %s177 = int_to_ptr.hbm [resolvable:$true] %s176
      %179 = dma.vmem_to_hbm [thread:$0]  %s175, 128, %s177, [#allocation3]
    $region33: #{tpu_custom_call.1} parent=1 // pred_fallthru
      _
    // Predicated region
    $region34: #{tpu_custom_call.1} parent=1 // pred_check
      _
    $region35: #{tpu_custom_call.1} parent=1 // pred_check_branch
      %181 = sbr.rel (0) target = $region37
    $region36: #{tpu_custom_call.1} parent=1 // pred_region
      %183 = dma.done [#allocation3], 128
    $region37: #{tpu_custom_call.1} parent=1 // pred_fallthru
      _
    %184 = vsyncpa [#allocation3], 1

</llo_original>
